<compile_context>
chip_gen: v6e
topology: v6e:2x2x1
jax: 0.10.0
libtpu: 0.0.40
codegen_flags: <defaults>
</compile_context>

<pallas_src>
import functools
import math

import jax
import jax.numpy as jnp
from jax import lax
from jax.experimental import pallas as pl
from jax.experimental.pallas import tpu as pltpu

# Module hyper-parameters (small, deterministic, in-script).
CLASSES = 16
SUB_CENTERS = 4
EMBEDDING_DIM = 32
MARGIN = 0.5
BATCH = 8

_MAX_TILE_N = 1024  # rows per batch tile; ~128 KiB of x at D=32, far below VMEM


def arcface_kernel(x_ref, w_ref, inw_ref, out_ref, *, cos_m, sin_m,
                   sub_centers, classes):
    # x_ref:   (TN, D)    f32 VMEM
    # w_ref:   (D, S*C)   f32 VMEM, column [s*C + c] = W[c, s, :] (unscaled)
    # inw_ref: (1, 1)     f32 SMEM, holds 1 / ||W||_F
    # out_ref: (TN, C)    f32 VMEM
    x = x_ref[...]                                             # (TN, D)
    w = w_ref[...]                                             # (D, S*C)

    # One fused MXU matmul over all sub-centers.
    scores = jnp.dot(x, w, preferred_element_type=jnp.float32)  # (TN, S*C)

    # MaxPool1d(SUB_CENTERS) on raw scores (positive scale commutes with max):
    # S-1 maximums over static lane slices of width C.
    t = scores[:, 0:classes]
    for s in range(1, sub_centers):
        t = jnp.maximum(t, scores[:, s * classes:(s + 1) * classes])

    # Per-row 1/||x|| on the EUP, fold in the 1/||W||_F SMEM scalar, and scale
    # only the C=16 pooled lanes.
    inv_norm_x = lax.rsqrt(jnp.sum(x * x, axis=1, keepdims=True))  # (TN, 1)
    t = t * (inv_norm_x * inw_ref[0, 0])                           # (TN, C)

    # cos(arccos(t) + m) == t*cos(m) - sin(m)*sqrt((1-t)(1+t)); clamp for the
    # arccos domain (torch would NaN on |t|>1 from rounding; we stay finite).
    t = jnp.clip(t, -1.0, 1.0)
    am = t * cos_m - sin_m * jnp.sqrt((1.0 - t) * (1.0 + t))       # (TN, C)

    # Softmax over the CLASSES axis (torch dim=1). Denominator reciprocal on
    # the EUP (approx) + one Newton step to recover full f32 precision.
    row_max = jnp.max(am, axis=1, keepdims=True)
    e = jnp.exp(am - row_max)
    denom = jnp.sum(e, axis=1, keepdims=True)
    r = pl.reciprocal(denom, approx=True)
    r = r * (2.0 - denom * r)            # Newton refinement (2 cheap VPU ops)
    out_ref[...] = e * r


def prepare_arcface_weights(w):
    """One-time weight layout: (C,S,D) -> (D, S*C) + 1/||W||_F SMEM scalar.

    Hoisted out of the forward path so it runs once for static (inference)
    weights instead of per call.
    """
    w = w.astype(jnp.float32)
    c, s, d = w.shape
    # (C,S,D) -> (S,C,D) -> (S*C, D) -> (D, S*C); columns are sub-center-major.
    w2d = jnp.transpose(jnp.transpose(w, (1, 0, 2)).reshape(s * c, d))
    inv_norm_w = (1.0 / jnp.linalg.norm(w)).reshape(1, 1).astype(jnp.float32)
    return w2d, inv_norm_w


def arcface_forward(x, w2d, inv_norm_w, m, *, classes=CLASSES,
                    sub_centers=SUB_CENTERS):
    """x: (N, D), w2d: (D, S*C), inv_norm_w: (1,1) -> logits (N, CLASSES, 1)."""
    x = x.astype(jnp.float32)
    n, d = x.shape

    # Batch tiling: one full-extent block up to 1024 rows; beyond that, tile at
    # <=1024 rows (multiple of 8) which also guarantees >=2 grid steps so the
    # "parallel" axis shards across both TensorCores on v7x.
    if n <= _MAX_TILE_N:
        tile_n = n
        grid_n = 1
    else:
        num_tiles = pl.cdiv(n, _MAX_TILE_N)
        tile_n = ((pl.cdiv(n, num_tiles) + 7) // 8) * 8
        grid_n = pl.cdiv(n, tile_n)

    kernel = functools.partial(
        arcface_kernel,
        cos_m=float(math.cos(m)),
        sin_m=float(math.sin(m)),
        sub_centers=sub_centers,
        classes=classes,
    )
    out = pl.pallas_call(
        kernel,
        out_shape=jax.ShapeDtypeStruct((n, classes), jnp.float32),
        grid=(grid_n,),
        in_specs=[
            pl.BlockSpec((tile_n, d), lambda i: (i, 0)),
            pl.BlockSpec((d, sub_centers * classes), lambda i: (0, 0)),
            pl.BlockSpec(memory_space=pltpu.MemorySpace.SMEM),
        ],
        out_specs=pl.BlockSpec((tile_n, classes), lambda i: (i, 0)),
        compiler_params=pltpu.CompilerParams(
            dimension_semantics=("parallel",)
        ),
    )(x, w2d, inv_norm_w)
    # Match torch output shape (N, CLASSES, 1).
    return out[:, :, None]


def arcface_reference(x, w, m):
    """Pure-JAX reference mirroring the torch code (for validation)."""
    norm_x = jnp.linalg.norm(x, axis=1)                       # (N,)
    norm_w = jnp.linalg.norm(w)                               # scalar
    sub_angles = jnp.einsum("csd,nd->ncs", w, x) / (norm_x * norm_w)[:, None, None]
    max_res = jnp.max(sub_angles, axis=2, keepdims=True)      # (N, C, 1)
    am = jnp.cos(jnp.arccos(max_res) + m)
    return jax.nn.softmax(am, axis=1)


if __name__ == "__main__":
    key = jax.random.PRNGKey(0)
    kx, kw = jax.random.split(key)
    x = jax.random.normal(kx, (BATCH, EMBEDDING_DIM), dtype=jnp.float32)
    w = jax.random.normal(kw, (CLASSES, SUB_CENTERS, EMBEDDING_DIM), dtype=jnp.float32)

    # Weight layout computed once (static inference weights), then the forward.
    w2d, inv_norm_w = prepare_arcface_weights(w)
    logits = arcface_forward(x, w2d, inv_norm_w, MARGIN)
    jax.block_until_ready(logits)

    ref = arcface_reference(x, w, MARGIN)
    assert logits.shape == (BATCH, CLASSES, 1)
    assert jnp.allclose(logits, ref, atol=1e-5, rtol=1e-5)

    print("KERNEL_OK")
</pallas_src>

<mosaic_0001>
module attributes {stable_mosaic.version = 11 : i64} {
  func.func @arcface_kernel(%arg0: i32, %arg1: memref<8x32xf32, #tpu.memory_space<vmem>>, %arg2: memref<32x64xf32, #tpu.memory_space<vmem>>, %arg3: memref<1x1xf32, #tpu.memory_space<smem>>, %arg4: memref<8x16xf32, #tpu.memory_space<vmem>>) attributes {dimension_semantics = [#tpu.dimension_semantics<parallel>], iteration_bounds = array<i64: 1>, scalar_prefetch = 0 : i64, scratch_operands = 0 : i64, tpu.core_type = #tpu.core_type<tc>, window_params = [{transform_indices = @transform_0, window_bounds = array<i64: 8, 32>}, {pipeline_mode = #tpu.pipeline_mode<synchronous>, transform_indices = @transform_1, window_bounds = array<i64: 32, 64>}, {transform_indices = @transform_2, window_bounds = array<i64: 1, 1>}, {transform_indices = @transform_3, window_bounds = array<i64: 8, 16>}]} {
    %c0 = arith.constant 0 : index
    %c0_0 = arith.constant 0 : index
    %0 = vector.load %arg1[%c0, %c0_0] : memref<8x32xf32, #tpu.memory_space<vmem>>, vector<8x32xf32>
    %c0_1 = arith.constant 0 : index
    %c0_2 = arith.constant 0 : index
    %1 = vector.load %arg2[%c0_1, %c0_2] : memref<32x64xf32, #tpu.memory_space<vmem>>, vector<32x64xf32>
    %cst = arith.constant dense<0.000000e+00> : vector<8x64xf32>
    %2 = tpu.matmul %0, %1, %cst {dimension_numbers = #tpu.dot_dimension_numbers<[1], [0], [0], [1], [0, 0, 1, 1], [], []>} : vector<8x32xf32>, vector<32x64xf32>, vector<8x64xf32> -> vector<8x64xf32>
    %3 = vector.extract_strided_slice %2 {offsets = [0, 0], sizes = [8, 16], strides = [1, 1]} : vector<8x64xf32> to vector<8x16xf32>
    %4 = vector.extract_strided_slice %2 {offsets = [0, 16], sizes = [8, 16], strides = [1, 1]} : vector<8x64xf32> to vector<8x16xf32>
    %5 = arith.maximumf %3, %4 : vector<8x16xf32>
    %6 = vector.extract_strided_slice %2 {offsets = [0, 32], sizes = [8, 16], strides = [1, 1]} : vector<8x64xf32> to vector<8x16xf32>
    %7 = arith.maximumf %5, %6 : vector<8x16xf32>
    %8 = vector.extract_strided_slice %2 {offsets = [0, 48], sizes = [8, 16], strides = [1, 1]} : vector<8x64xf32> to vector<8x16xf32>
    %9 = arith.maximumf %7, %8 : vector<8x16xf32>
    %10 = arith.mulf %0, %0 : vector<8x32xf32>
    %cst_3 = arith.constant dense<0.000000e+00> : vector<8xf32>
    %11 = vector.multi_reduction <add>, %10, %cst_3 [1] : vector<8x32xf32> to vector<8xf32>
    %12 = vector.shape_cast %11 : vector<8xf32> to vector<8x1xf32>
    %13 = math.rsqrt %12 : vector<8x1xf32>
    %c0_4 = arith.constant 0 : index
    %c0_5 = arith.constant 0 : index
    %14 = memref.load %arg3[%c0_4, %c0_5] : memref<1x1xf32, #tpu.memory_space<smem>>
    %15 = vector.broadcast %14 : f32 to vector<8x1xf32>
    %16 = arith.mulf %13, %15 : vector<8x1xf32>
    %17 = vector.broadcast %16 : vector<8x1xf32> to vector<8x16xf32>
    %18 = arith.mulf %9, %17 : vector<8x16xf32>
    %cst_6 = arith.constant -1.000000e+00 : f32
    %cst_7 = arith.constant 1.000000e+00 : f32
    %19 = vector.broadcast %cst_6 : f32 to vector<8x16xf32>
    %20 = arith.maximumf %19, %18 : vector<8x16xf32>
    %21 = vector.broadcast %cst_7 : f32 to vector<8x16xf32>
    %22 = arith.minimumf %21, %20 : vector<8x16xf32>
    %cst_8 = arith.constant 0.87758255 : f32
    %23 = vector.broadcast %cst_8 : f32 to vector<8x16xf32>
    %24 = arith.mulf %22, %23 : vector<8x16xf32>
    %cst_9 = arith.constant 1.000000e+00 : f32
    %25 = vector.broadcast %cst_9 : f32 to vector<8x16xf32>
    %26 = arith.subf %25, %22 : vector<8x16xf32>
    %cst_10 = arith.constant 1.000000e+00 : f32
    %27 = vector.broadcast %cst_10 : f32 to vector<8x16xf32>
    %28 = arith.addf %27, %22 : vector<8x16xf32>
    %29 = arith.mulf %26, %28 : vector<8x16xf32>
    %30 = math.sqrt %29 : vector<8x16xf32>
    %cst_11 = arith.constant 0.47942555 : f32
    %31 = vector.broadcast %cst_11 : f32 to vector<8x16xf32>
    %32 = arith.mulf %31, %30 : vector<8x16xf32>
    %33 = arith.subf %24, %32 : vector<8x16xf32>
    %cst_12 = arith.constant dense<0xFF800000> : vector<8xf32>
    %34 = vector.multi_reduction <maximumf>, %33, %cst_12 [1] : vector<8x16xf32> to vector<8xf32>
    %35 = vector.shape_cast %34 : vector<8xf32> to vector<8x1xf32>
    %36 = vector.broadcast %35 : vector<8x1xf32> to vector<8x16xf32>
    %37 = arith.subf %33, %36 : vector<8x16xf32>
    %38 = math.exp %37 : vector<8x16xf32>
    %cst_13 = arith.constant dense<0.000000e+00> : vector<8xf32>
    %39 = vector.multi_reduction <add>, %38, %cst_13 [1] : vector<8x16xf32> to vector<8xf32>
    %40 = vector.shape_cast %39 : vector<8xf32> to vector<8x1xf32>
    %41 = tpu.reciprocal %40 {approx = true} : vector<8x1xf32> -> vector<8x1xf32>
    %42 = arith.mulf %40, %41 : vector<8x1xf32>
    %cst_14 = arith.constant 2.000000e+00 : f32
    %43 = vector.broadcast %cst_14 : f32 to vector<8x1xf32>
    %44 = arith.subf %43, %42 : vector<8x1xf32>
    %45 = arith.mulf %41, %44 : vector<8x1xf32>
    %46 = vector.broadcast %45 : vector<8x1xf32> to vector<8x16xf32>
    %47 = arith.mulf %38, %46 : vector<8x16xf32>
    %c0_15 = arith.constant 0 : index
    %c0_16 = arith.constant 0 : index
    %48 = vector.load %arg4[%c0_15, %c0_16] : memref<8x16xf32, #tpu.memory_space<vmem>>, vector<8x16xf32>
    tpu.vector_store %arg4[%c0_15, %c0_16], %47 {strides = array<i32>} : memref<8x16xf32, #tpu.memory_space<vmem>>, vector<8x16xf32>,
    return
  }
  func.func @transform_0(%arg0: i32) -> (i32, i32) {
    %c0_i32 = arith.constant 0 : i32
    %c0_i32_0 = arith.constant 0 : i32
    return %arg0, %c0_i32 : i32, i32
  }
  func.func @transform_1(%arg0: i32) -> (i32, i32) {
    %c0_i32 = arith.constant 0 : i32
    %c0_i32_0 = arith.constant 0 : i32
    %c0_i32_1 = arith.constant 0 : i32
    return %c0_i32, %c0_i32_0 : i32, i32
  }
  func.func @transform_2(%arg0: i32) -> (i32, i32) {
    %c0_i32 = arith.constant 0 : i32
    %c0_i32_0 = arith.constant 0 : i32
    %c0_i32_1 = arith.constant 0 : i32
    return %c0_i32, %c0_i32_0 : i32, i32
  }
  func.func @transform_3(%arg0: i32) -> (i32, i32) {
    %c0_i32 = arith.constant 0 : i32
    %c0_i32_0 = arith.constant 0 : i32
    return %arg0, %c0_i32 : i32, i32
  }
}

</mosaic_0001>

<llo_original>
// kernel: tpu_custom_call.1
$region0: #{tpu_custom_call.1}
  #allocation0 [shape = 'u32[]', space=smem, size = 0x4, offset = 0x4, fixed_abs, tag = 'smem constant byte address 0x4 - core index']
  #allocation1 [shape = 'u32[144,128]{1,0:T(1,128)}', space=vmem, size = 0x12000, scoped, tag = 'internal scratch']
  #allocation2 [shape = 'f32[1,1]{1,0:T(1,128)S(6)}', space=smem, size = 0x200, scoped, tag = 'scoped memory for tpu_custom_call.1']
  %s0 = inlined_call_operand.hbm [shape: f32[8,32], index: 0, kind: input, shape index: {}]
  %s1 = inlined_call_operand.hbm [shape: f32[32,64], index: 1, kind: input, shape index: {}]
  %s2 = inlined_call_operand.<no memory space> [shape: f32[1,1], index: 2, kind: input, shape index: {}]
  %s3 = inlined_call_operand.hbm [shape: f32[8,16], index: 3, kind: output, shape index: {}]
  %s4 = sld [smem:[#allocation0]]
  $region30: #{tpu_custom_call.1} parent=0
    _
  %s6 = ssub.s32 1, %s4
  %s7 = scalar_select 0, %s6, %s4
  %8 = sst [smem:[#allocation2]] %s2
  $region1: #{tpu_custom_call.1} parent=0
    #allocation3 [shape = 'u8[4096]{0}', space=vmem, size = 0x1000, scoped, tag = 'input window, operand 0, single buffered']
    #allocation4 [shape = 's32[1]{0}', space=sflag, size = 0x4, scoped, tag = 'scoped memory for tpu_custom_call.1']
    #allocation5 [shape = 's32[1]{0}', space=sflag, size = 0x4, scoped, tag = 'scoped memory for tpu_custom_call.1']
    #allocation6 [shape = 'u8[16384]{0}', space=vmem, size = 0x4000, scoped, tag = 'input window, operand 1, single buffered']
    #allocation7 [shape = 's32[1]{0}', space=sflag, size = 0x4, scoped, tag = 'scoped memory for tpu_custom_call.1']
    #allocation8 [shape = 'u8[4096]{0}', space=vmem, size = 0x1000, scoped, tag = 'output window, operand 0, single buffered']
    %9 = vsyncpa [#allocation4], 0
    %10 = vsyncpa [#allocation7], 0
    %11 = vsyncpa [#allocation5], 0
    // Predicated region
    $region2: #{tpu_custom_call.1} parent=1 // pred_check
      _
    $region3: #{tpu_custom_call.1} parent=1 // pred_check_branch
      %13 = sbr.rel (0) target = $region5
    $region4: #{tpu_custom_call.1} parent=1 // pred_region
      %s15 = ssub.s32 128, 128
      %16 = vsyncadd [#allocation4], %s15
      %s18 = sshll.u32 [#allocation3], 4
      %s19 = int_to_ptr.vmem [resolvable:$true] %s18
      %21 = dma.hbm_to_vmem [thread:$0]  %s0, 128, %s19, [#allocation4]
    $region5: #{tpu_custom_call.1} parent=1 // pred_fallthru
      _
    // Predicated region
    $region6: #{tpu_custom_call.1} parent=1 // pred_check
      _
    $region7: #{tpu_custom_call.1} parent=1 // pred_check_branch
      %23 = sbr.rel (0) target = $region9
    $region8: #{tpu_custom_call.1} parent=1 // pred_region
      %s25 = ssub.s32 512, 512
      %26 = vsyncadd [#allocation7], %s25
      %s27 = sshll.u32 [#allocation6], 4
      %s28 = int_to_ptr.vmem [resolvable:$true] %s27
      %33 = dma.hbm_to_vmem [thread:$0]  %s1, 512, %s28, [#allocation7], 128, 128, 8
    $region9: #{tpu_custom_call.1} parent=1 // pred_fallthru
      _
    // Predicated region
    $region10: #{tpu_custom_call.1} parent=1 // pred_check
      _
    $region11: #{tpu_custom_call.1} parent=1 // pred_check_branch
      %35 = sbr.rel (0) target = $region13
    $region12: #{tpu_custom_call.1} parent=1 // pred_region
      _
    $region13: #{tpu_custom_call.1} parent=1 // pred_fallthru
      _
    // Predicated region
    $region14: #{tpu_custom_call.1} parent=1 // pred_check
      _
    $region15: #{tpu_custom_call.1} parent=1 // pred_check_branch
      %37 = sbr.rel (0) target = $region17
    $region16: #{tpu_custom_call.1} parent=1 // pred_region
      %38 = dma.done [#allocation4], 128
    $region17: #{tpu_custom_call.1} parent=1 // pred_fallthru
      _
    // Predicated region
    $region18: #{tpu_custom_call.1} parent=1 // pred_check
      _
    $region19: #{tpu_custom_call.1} parent=1 // pred_check_branch
      %40 = sbr.rel (0) target = $region21
    $region20: #{tpu_custom_call.1} parent=1 // pred_region
      %41 = dma.done [#allocation7], 512
    $region21: #{tpu_custom_call.1} parent=1 // pred_fallthru
      _
    %v42 = vld [vmem:[#allocation3] sm:$0xff]
    %v43 = vld [vmem:[#allocation6] sm:$0xff]
    %v44 = vld [vmem:[#allocation6 + $0x8] sm:$0xff]
    %v45 = vld [vmem:[#allocation6 + $0x10] sm:$0xff]
    %v46 = vld [vmem:[#allocation6 + $0x18] sm:$0xff]
    %vm47 = vcmask 261120
    %v49 = vsel %vm47, %v42, 0
    %51 = vmatprep.subr.mxu0 0.0
    %52 = vmatpush1.msra.mxu0 0.0
    %53 = vmatprep.subr.mxu0 0.0
    %54 = vmatpush1.msra.mxu0 0.0
    %55 = vmatprep.subr.mxu0 0.0
    %56 = vmatpush1.msra.mxu0 0.0
    %57 = vmatprep.subr.mxu0 0.0
    %58 = vmatpush1.msra.mxu0 0.0
    %59 = vmatprep.subr.mxu0 0.0
    %60 = vmatpush1.msra.mxu0 0.0
    %61 = vmatprep.subr.mxu0 0.0
    %62 = vmatpush1.msra.mxu0 0.0
    %63 = vmatprep.subr.mxu0 0.0
    %64 = vmatpush1.msra.mxu0 0.0
    %65 = vmatprep.subr.mxu0 0.0
    %66 = vmatpush1.msra.mxu0 0.0
    %67 = vmatprep.subr.mxu0 0.0
    %68 = vmatpush1.msra.mxu0 0.0
    %69 = vmatprep.subr.mxu0 0.0
    %70 = vmatpush1.msra.mxu0 0.0
    %71 = vmatprep.subr.mxu0 0.0
    %72 = vmatpush1.msra.mxu0 0.0
    %73 = vmatprep.subr.mxu0 0.0
    %74 = vmatpush1.msra.mxu0 0.0
    %75 = vmatprep.subr.mxu0 0.0
    %76 = vmatpush1.msra.mxu0 %v46
    %77 = vmatprep.subr.mxu0 0.0
    %78 = vmatpush1.msra.mxu0 %v45
    %79 = vmatprep.subr.mxu0 0.0
    %80 = vmatpush1.msra.mxu0 %v44
    %81 = vmatprep.subr.mxu0 0.0
    %82 = vmatpush1.msra.mxu0 %v43
    %83 = vmatprep.subr.mxu0 0.0
    %84 = vmatpush2.msra.mxu0 0.0
    %85 = vmatprep.subr.mxu0 0.0
    %86 = vmatpush2.msra.mxu0 0.0
    %87 = vmatprep.subr.mxu0 0.0
    %88 = vmatpush2.msra.mxu0 0.0
    %89 = vmatprep.subr.mxu0 0.0
    %90 = vmatpush2.msra.mxu0 0.0
    %91 = vmatprep.subr.mxu0 0.0
    %92 = vmatpush2.msra.mxu0 0.0
    %93 = vmatprep.subr.mxu0 0.0
    %94 = vmatpush2.msra.mxu0 0.0
    %95 = vmatprep.subr.mxu0 0.0
    %96 = vmatpush2.msra.mxu0 0.0
    %97 = vmatprep.subr.mxu0 0.0
    %98 = vmatpush2.msra.mxu0 0.0
    %99 = vmatprep.subr.mxu0 0.0
    %100 = vmatpush2.msra.mxu0 0.0
    %101 = vmatprep.subr.mxu0 0.0
    %102 = vmatpush2.msra.mxu0 0.0
    %103 = vmatprep.subr.mxu0 0.0
    %104 = vmatpush2.msra.mxu0 0.0
    %105 = vmatprep.subr.mxu0 0.0
    %106 = vmatpush2.msra.mxu0 0.0
    %107 = vmatprep.subr.mxu0 0.0
    %108 = vmatpush2.msra.mxu0 0.0
    %109 = vmatprep.subr.mxu0 0.0
    %110 = vmatpush2.msra.mxu0 0.0
    %111 = vmatprep.subr.mxu0 0.0
    %112 = vmatpush2.msra.mxu0 0.0
    %113 = vmatprep.subr.mxu0 0.0
    %114 = vmatpush2.msra.mxu0 0.0
    %115 = vmatprep.mubr.f32.mxu0 0.0
    %116 = vmatmul.mubr.f32.gmra.mxu0 %v49
    %v117 = vpop.f32.mrf.mxu0
    %v118 = vadd.f32 0.0, %v117
    %v119 = vpop.f32.mrf.mxu0
    %120 = vdwg.mxu0
    %122 = vrot.lane.b32.xlu0 %v118, 112
    %v123 = vpop.permute.xlu0 %122
    %v125 = vmax.f32 %v118, %v123
    %126 = vrot.lane.b32.xlu0 %v118, 96
    %v127 = vpop.permute.xlu0 %126
    %v129 = vmax.f32 %v125, %v127
    %130 = vrot.lane.b32.xlu0 %v118, 80
    %v131 = vpop.permute.xlu0 %130
    %v133 = vmax.f32 %v129, %v131
    %v134 = vmul.f32 %v42, %v42
    %v135 = vsel %vm47, %v134, 0.0
    %136 = vadd.xlane.f32.xlu0 %v135
    %v137 = vpop.xlane.xlu0 %136
    %v138 = vrsqrt.pop %v137
    %s139 = sld [smem:[#allocation2]]
    %v140 = vstv %s139
    %v141 = vmul.f32 %v138, %v140
    %v142 = vmul.f32 %v133, %v141
    %v143 = vmax.f32 %v142, -1.0
    %v144 = vmin.f32 %v143, 1.0
    %v145 = vmul.f32 %v144, 0.87758255
    %v146 = vsub.f32 1.0, %v144
    %v147 = vadd.f32 %v144, 1.0
    %v148 = vmul.f32 %v146, %v147
    %v149 = vrsqrt.pop %v148
    %v150 = vmul.f32 %v148, %v149
    %vm151 = vcmp.eq.f32.partialorder %v148, inf
    %v152 = vsel %vm151, %v148, %v150
    %vm153 = vcmp.eq.f32.partialorder %v148, 0.0
    %v154 = vand.u32 %v148, 2147483648
    %v155 = vsel %vm153, %v154, %v152
    %v156 = vmul.f32 %v155, 0.47942555
    %v157 = vsub.f32 %v145, %v156
    %vm158 = vcmask 130048
    %v159 = vsel %vm158, %v157, -inf
    %160 = vmax.xlane.f32.xlu0 %v159
    %v161 = vpop.xlane.xlu0 %160
    %v162 = vsub.f32 %v157, %v161
    %v163 = vmul.f32 %v162, 1.442695
    %v164 = vpow.pop %v163
    %v165 = vsel %vm158, %v164, 0.0
    %166 = vadd.xlane.f32.xlu0 %v165
    %v167 = vpop.xlane.xlu0 %166
    %v168 = vrcp.pop %v167
    %v169 = vmul.f32 %v167, %v168
    %v170 = vsub.f32 2.0, %v169
    %v171 = vmul.f32 %v168, %v170
    %v172 = vmul.f32 %v164, %v171
    %173 = vst.msk [vmem:[#allocation8] sm:$0xff] %vm158, %v172
    // Predicated region
    $region22: #{tpu_custom_call.1} parent=1 // pred_check
      _
    $region23: #{tpu_custom_call.1} parent=1 // pred_check_branch
      %175 = sbr.rel (0) target = $region25
    $region24: #{tpu_custom_call.1} parent=1 // pred_region
      %s177 = ssub.s32 128, 128
      %178 = vsyncadd [#allocation5], %s177
      %s180 = sshll.u32 [#allocation8], 4
      %s181 = int_to_ptr.vmem [resolvable:$true] %s180
      %183 = dma.vmem_to_hbm [thread:$0]  %s181, 128, %s3, [#allocation5]
    $region25: #{tpu_custom_call.1} parent=1 // pred_fallthru
      _
    // Predicated region
    $region26: #{tpu_custom_call.1} parent=1 // pred_check
      _
    $region27: #{tpu_custom_call.1} parent=1 // pred_check_branch
      %185 = sbr.rel (0) target = $region29
    $region28: #{tpu_custom_call.1} parent=1 // pred_region
      %186 = dma.done [#allocation5], 128
    $region29: #{tpu_custom_call.1} parent=1 // pred_fallthru
      _
    %187 = vsyncpa [#allocation4], 1
    %188 = vsyncpa [#allocation7], 1
    %189 = vsyncpa [#allocation5], 1

</llo_original>
